<compile_context>
chip_gen: v5e
topology: v5e:2x2
jax: 0.10.0
libtpu: 0.0.40
codegen_flags: <defaults>
</compile_context>

<pallas_src>
import functools

import jax
import jax.numpy as jnp
from jax.experimental import pallas as pl
from jax.experimental.pallas import tpu as pltpu

_MiB = 1024 * 1024


@functools.lru_cache(maxsize=None)
def _chip_config():
    """Per-generation block-size / VMEM-budget / compute-dtype heuristics."""
    kind = ""
    try:
        kind = jax.devices()[0].device_kind.lower()
    except Exception:  # pragma: no cover - defensive
        pass
    if "v5 lite" in kind or "v5lite" in kind or "v5e" in kind:
        # v5e: ~0.82 TB/s HBM, 16 MiB scoped-VMEM default.  2 MiB blocks keep
        # the ~0.35 us/step cost <8% and 4 x 2 MiB stays under the default
        # scoped limit (no explicit vmem_limit needed).  No bf16 VALU/EUP on
        # v5e -> always compute in f32.
        return dict(gen="v5e", block_bytes=2 * _MiB, vmem_limit=None,
                    bf16_compute=False)
    if "v6" in kind:
        # v6e: 128 MiB VMEM, ~1.3-1.4 TB/s HBM.  8 MiB blocks amortize the
        # per-step overhead to <2%; raise the 32 MiB scoped default so the
        # 4 x 8 MiB double-buffered in+out footprint has headroom.
        return dict(gen="v6e", block_bytes=8 * _MiB, vmem_limit=64 * _MiB,
                    bf16_compute=True)
    if "v7" in kind:
        # v7x: 3.2 TB/s HBM makes steps very short -> keep big (8 MiB) blocks,
        # but only 64 MiB physical VMEM (32 MiB scoped default) -> explicit
        # 48 MiB limit: 4 x 8 MiB = 32 MiB footprint with headroom under 64.
        return dict(gen="v7x", block_bytes=8 * _MiB, vmem_limit=48 * _MiB,
                    bf16_compute=True)
    # Unknown generation (v4 / v5p / interpret): conservative middle ground.
    return dict(gen="other", block_bytes=4 * _MiB, vmem_limit=32 * _MiB,
                bf16_compute=False)


def _pow_int_chain(y, e):
    """y ** e for a small positive int e via exponentiation-by-squaring (VPU)."""
    acc = None
    base = y
    while e:
        if e & 1:
            acc = base if acc is None else acc * base
        e >>= 1
        if e:
            base = base * base
    return acc


def _qexp_kernel(x_ref, o_ref, *, one_minus_q, exponent, mode, int_exp,
                 compute_dtype, approx_recip):
    x = x_ref[...].astype(compute_dtype)
    # relu(.) followed by clamp(min=1e-8) collapses into a single max; Python
    # float constants are weakly typed so bf16 compute stays in bf16.
    y = jnp.maximum(1.0 + one_minus_q * x, 1e-8)

    if mode == "int":
        p = _pow_int_chain(y, abs(int_exp))
        if int_exp < 0:
            # Exact reciprocal for f32 outputs (keeps pow()-level accuracy);
            # a single approximate EUP vrcp is plenty for bf16 outputs.
            p = pl.reciprocal(p, approx=approx_recip)
    elif mode == "halfint":
        if int_exp == 1:
            p = jnp.sqrt(y)
        elif int_exp == -1:
            p = jax.lax.rsqrt(y)
        else:
            p = _pow_int_chain(jnp.sqrt(y), abs(int_exp))
            if int_exp < 0:
                p = pl.reciprocal(p, approx=approx_recip)
    else:
        # Generic exponent: y > 0 is guaranteed by the clamp, so pow == exp(log).
        p = jnp.exp(exponent * jnp.log(y))

    o_ref[...] = p.astype(o_ref.dtype)


def _qexp_jnp(x, q):
    """Plain-jnp fallback (tiny tensors and the <128-element ragged tail)."""
    xf = x.astype(jnp.float32)
    y = jnp.maximum(1.0 + (1.0 - q) * xf, 1e-8)
    return (y ** (1.0 / (1.0 - q))).astype(x.dtype)


def qexp_pallas(x, q, *, min_pallas_elems=65536, target_block_bytes=None):
    """Elementwise Tsallis q-exponential, matching the PyTorch qExp module."""
    q = float(q)
    assert q != 1.0, "q must differ from 1.0 (as in the PyTorch module)"
    orig_shape = x.shape
    n = x.size
    if n == 0:
        return x
    if n < min_pallas_elems:
        # For tiny tensors, fixed pallas_call + pipeline startup dominates;
        # XLA's fused elementwise is as fast or faster.
        return _qexp_jnp(x, q)

    cfg = _chip_config()
    block_bytes = int(target_block_bytes or cfg["block_bytes"])
    itemsize = jnp.dtype(x.dtype).itemsize
    is_bf16 = x.dtype == jnp.bfloat16

    one_minus_q = 1.0 - q
    exponent = 1.0 / one_minus_q

    # Exponent special-casing: integer / half-integer exponents run as VPU
    # multiply chains (+ one EUP sqrt), keeping the EUP off the critical path.
    #  * positive-chain cap: 16 mults has ample VALU slack on v5e/v6e; for
    #    bf16 I/O on v7x the high element rate would make a long chain
    #    VPU-bound, so cap at 8 there and fall back to exp/log.
    #  * negative-exponent cap of 4: y >= 1e-8 => y**4 >= 1e-32 stays above
    #    the f32/bf16 min normal; larger |e| could flush the intermediate to
    #    zero and return inf where pow() returns a large finite value.
    pos_cap = 8 if (is_bf16 and cfg["gen"] == "v7x") else 16
    neg_cap = 4
    mode, int_exp = "generic", 0
    if abs(exponent - round(exponent)) < 1e-9:
        e_i = int(round(exponent))
        if 1 <= e_i <= pos_cap or -neg_cap <= e_i <= -1:
            mode, int_exp = "int", e_i
    elif abs(2.0 * exponent - round(2.0 * exponent)) < 1e-9:
        e_2 = int(round(2.0 * exponent))  # odd: exponent == e_2 / 2
        if (0 < e_2 <= 2 * pos_cap - 1) or (-9 <= e_2 < 0):
            mode, int_exp = "halfint", e_2

    # bf16 I/O on v6e/v7x: keep the pure multiply/sqrt chains in bf16 (halves
    # VALU work and vreg pressure).  Paths with reciprocal/rsqrt and the
    # generic exp/log path stay in f32 for accuracy.
    if is_bf16 and cfg["bf16_compute"] and mode in ("int", "halfint") and int_exp > 0:
        compute_dtype = jnp.bfloat16
    else:
        compute_dtype = jnp.float32
    approx_recip = is_bf16  # approx vrcp is plenty for 8-bit-mantissa outputs

    # Lane-dense 2D slab over the 128-aligned prefix; <128-element tail (rare)
    # is handled with plain jnp so there are no full-array pad/slice passes.
    xf = x.reshape(-1)
    n_main = n - (n % 128)
    if n_main == 0:
        return _qexp_jnp(x, q)
    if n_main == n:
        main, tail = xf, None
    else:
        main, tail = xf[:n_main], xf[n_main:]

    lane = 128
    for cand in (1024, 512, 256):
        if n_main % cand == 0:
            lane = cand
            break
    rows = n_main // lane
    x2d = main.reshape(rows, lane)
    sub = 8 if itemsize >= 4 else (16 if itemsize == 2 else 32)

    # Block sizing by BYTES (not elements): ~2-8 MiB per generation keeps the
    # ~0.35 us/step pipeline overhead <5% of step time at any dtype.
    target_rows = max(sub, (block_bytes // (lane * itemsize)) // sub * sub)
    tile_rows = min(rows, target_rows)
    if tile_rows == rows and rows > sub:
        # Keep >= 2 grid steps so the "parallel" axis can shard across both of
        # v7x's TensorCores (a single extra step is negligible on 1-TC chips).
        tile_rows = max(sub, ((rows + 1) // 2) // sub * sub)
    grid = (pl.cdiv(rows, tile_rows),)  # ragged last block masked by Pallas

    cp_kwargs = dict(dimension_semantics=("parallel",))
    if cfg["vmem_limit"] is not None:
        cp_kwargs["vmem_limit_bytes"] = int(cfg["vmem_limit"])

    out2d = pl.pallas_call(
        functools.partial(
            _qexp_kernel,
            one_minus_q=one_minus_q,
            exponent=exponent,
            mode=mode,
            int_exp=int_exp,
            compute_dtype=compute_dtype,
            approx_recip=approx_recip,
        ),
        out_shape=jax.ShapeDtypeStruct((rows, lane), x.dtype),
        grid=grid,
        in_specs=[pl.BlockSpec((tile_rows, lane), lambda i: (i, 0))],
        out_specs=pl.BlockSpec((tile_rows, lane), lambda i: (i, 0)),
        compiler_params=pltpu.CompilerParams(**cp_kwargs),
    )(x2d)

    main_out = out2d.reshape(-1)
    if tail is None:
        return main_out.reshape(orig_shape)
    tail_out = _qexp_jnp(tail, q)
    return jnp.concatenate([main_out, tail_out]).reshape(orig_shape)


class QExpPallas:
    """Mirror of the PyTorch qExp module (forward only)."""

    def __init__(self, q):
        self.q = float(q)

    def __call__(self, x):
        return qexp_pallas(x, self.q)


def _qexp_ref(x, q):
    y = 1.0 + (1.0 - q) * x.astype(jnp.float32)
    y = jnp.maximum(jnp.maximum(y, 0.0), 1e-8)
    return y ** (1.0 / (1.0 - q))


if __name__ == "__main__":
    key = jax.random.PRNGKey(0)
    # NCHW like the PyTorch module: batch=2, channels=4, spatial=16x16.
    x = jax.random.normal(key, (2, 4, 16, 16), dtype=jnp.float32)

    # min_pallas_elems=0 forces the Pallas kernel even at this small test size
    # (the default wrapper would route tiny tensors to plain jnp).
    cases = (
        0.5,     # exponent  2    -> integer multiply-chain path
        0.3,     # exponent ~1.43 -> generic exp/log path
        2.0,     # exponent -1    -> reciprocal path
        -1.0,    # exponent  0.5  -> sqrt path
        3.0,     # exponent -0.5  -> rsqrt path
        0.6,     # exponent  2.5  -> half-integer (sqrt * chain) path
        1.4,     # exponent -2.5  -> negative half-integer path
        1.0625,  # exponent -16   -> beyond the negative cap -> generic path
    )
    for q in cases:
        out = jax.block_until_ready(qexp_pallas(x, q, min_pallas_elems=0))
        ref = _qexp_ref(x, q)
        assert out.shape == x.shape and out.dtype == x.dtype
        assert jnp.allclose(out, ref, atol=1e-5, rtol=1e-5), f"mismatch for q={q}"

    # Ragged size (n % 128 != 0): aligned prefix through the kernel, <128-elem
    # tail through plain jnp (no full-array pad/slice HBM passes).
    x_rag = jax.random.normal(jax.random.PRNGKey(1), (2, 4, 17, 17),
                              dtype=jnp.float32)
    out_rag = jax.block_until_ready(qexp_pallas(x_rag, 0.5, min_pallas_elems=0))
    assert out_rag.shape == x_rag.shape
    assert jnp.allclose(out_rag, _qexp_ref(x_rag, 0.5), atol=1e-5, rtol=1e-5)

    # Native bf16 I/O (bf16 compute chain on v6e/v7x, f32 elsewhere).
    x_bf16 = x.astype(jnp.bfloat16)
    for q in (0.5, 0.6, 2.0):
        out_bf16 = jax.block_until_ready(qexp_pallas(x_bf16, q, min_pallas_elems=0))
        ref_bf16 = _qexp_ref(x_bf16.astype(jnp.float32), q)
        assert out_bf16.shape == x_bf16.shape and out_bf16.dtype == jnp.bfloat16
        assert jnp.allclose(out_bf16.astype(jnp.float32), ref_bf16,
                            atol=5e-2, rtol=5e-2), f"bf16 mismatch for q={q}"

    # Default wrapper path for tiny tensors (jnp fallback) stays correct.
    mod = QExpPallas(0.5)
    out_default = jax.block_until_ready(mod(x))
    assert jnp.allclose(out_default, _qexp_ref(x, 0.5), atol=1e-5, rtol=1e-5)

    print("KERNEL_OK")
</pallas_src>

<mosaic_0001>
module attributes {stable_mosaic.version = 11 : i64} {
  func.func @_qexp_kernel(%arg0: i32, %arg1: memref<2x1024xf32, #tpu.memory_space<vmem>>, %arg2: memref<2x1024xf32, #tpu.memory_space<vmem>>) attributes {dimension_semantics = [#tpu.dimension_semantics<parallel>], iteration_bounds = array<i64: 1>, scalar_prefetch = 0 : i64, scratch_operands = 0 : i64, tpu.core_type = #tpu.core_type<tc>, window_params = [{transform_indices = @transform_0, window_bounds = array<i64: 2, 1024>}, {transform_indices = @transform_1, window_bounds = array<i64: 2, 1024>}]} {
    %c0 = arith.constant 0 : index
    %c0_0 = arith.constant 0 : index
    %0 = vector.load %arg1[%c0, %c0_0] : memref<2x1024xf32, #tpu.memory_space<vmem>>, vector<2x1024xf32>
    %cst = arith.constant 5.000000e-01 : f32
    %1 = vector.broadcast %cst : f32 to vector<2x1024xf32>
    %2 = arith.mulf %1, %0 : vector<2x1024xf32>
    %cst_1 = arith.constant 1.000000e+00 : f32
    %3 = vector.broadcast %cst_1 : f32 to vector<2x1024xf32>
    %4 = arith.addf %3, %2 : vector<2x1024xf32>
    %cst_2 = arith.constant 9.99999993E-9 : f32
    %5 = vector.broadcast %cst_2 : f32 to vector<2x1024xf32>
    %6 = arith.maximumf %4, %5 : vector<2x1024xf32>
    %7 = arith.mulf %6, %6 : vector<2x1024xf32>
    %c0_3 = arith.constant 0 : index
    %c0_4 = arith.constant 0 : index
    %8 = vector.load %arg2[%c0_3, %c0_4] : memref<2x1024xf32, #tpu.memory_space<vmem>>, vector<2x1024xf32>
    tpu.vector_store %arg2[%c0_3, %c0_4], %7 {strides = array<i32>} : memref<2x1024xf32, #tpu.memory_space<vmem>>, vector<2x1024xf32>,
    return
  }
  func.func @transform_0(%arg0: i32) -> (i32, i32) {
    %c0_i32 = arith.constant 0 : i32
    %c0_i32_0 = arith.constant 0 : i32
    return %arg0, %c0_i32 : i32, i32
  }
  func.func @transform_1(%arg0: i32) -> (i32, i32) {
    %c0_i32 = arith.constant 0 : i32
    %c0_i32_0 = arith.constant 0 : i32
    return %arg0, %c0_i32 : i32, i32
  }
}

</mosaic_0001>

<llo_original>
// kernel: tpu_custom_call.1
$region0: #{tpu_custom_call.1}
  #allocation0 [shape = 'u32[]', space=smem, size = 0x4, offset = 0x4, fixed_abs, tag = 'smem constant byte address 0x4 - core index']
  #allocation1 [shape = 'u32[72,128]{1,0:T(1,128)}', space=vmem, size = 0x9000, scoped, tag = 'internal scratch']
  %s0 = inlined_call_operand.hbm [shape: f32[2,1024], index: 0, kind: input, shape index: {}]
  %s1 = inlined_call_operand.hbm [shape: f32[2,1024], index: 1, kind: output, shape index: {}]
  %s2 = sld [smem:[#allocation0]]
  $region18: #{tpu_custom_call.1} parent=0
    _
  %s4 = ssub.s32 1, %s2
  %s5 = scalar_select 0, %s4, %s2
  $region1: #{tpu_custom_call.1} parent=0
    #allocation2 [shape = 'u8[8192]{0}', space=vmem, size = 0x2000, scoped, tag = 'input window, operand 0, single buffered']
    #allocation3 [shape = 's32[1]{0}', space=sflag, size = 0x4, scoped, tag = 'scoped memory for tpu_custom_call.1']
    #allocation4 [shape = 's32[1]{0}', space=sflag, size = 0x4, scoped, tag = 'scoped memory for tpu_custom_call.1']
    #allocation5 [shape = 'u8[8192]{0}', space=vmem, size = 0x2000, scoped, tag = 'output window, operand 0, single buffered']
    %6 = vsyncpa [#allocation3], 0
    %7 = vsyncpa [#allocation4], 0
    // Predicated region
    $region2: #{tpu_custom_call.1} parent=1 // pred_check
      _
    $region3: #{tpu_custom_call.1} parent=1 // pred_check_branch
      %9 = sbr.rel (0) target = $region5
    $region4: #{tpu_custom_call.1} parent=1 // pred_region
      %11 = vsyncadd [#allocation3], 0
      %s13 = sshll.u32 %s0, 4
      %s14 = int_to_ptr.hbm [resolvable:$true] %s13
      %s15 = sshll.u32 [#allocation2], 4
      %s16 = int_to_ptr.vmem [resolvable:$true] %s15
      %18 = dma.hbm_to_vmem [thread:$0]  %s14, 256, %s16, [#allocation3]
    $region5: #{tpu_custom_call.1} parent=1 // pred_fallthru
      _
    // Predicated region
    $region6: #{tpu_custom_call.1} parent=1 // pred_check
      _
    $region7: #{tpu_custom_call.1} parent=1 // pred_check_branch
      %20 = sbr.rel (0) target = $region9
    $region8: #{tpu_custom_call.1} parent=1 // pred_region
      %22 = dma.done [#allocation3], 256
    $region9: #{tpu_custom_call.1} parent=1 // pred_fallthru
      _
    %v23 = vld [vmem:[#allocation2] sm:$0xff]
    %v24 = vld [vmem:[#allocation2 + $0x8] sm:$0xff]
    %v25 = vmul.f32 %v23, 0.5
    %v26 = vmul.f32 %v24, 0.5
    %v27 = vadd.f32 %v25, 1.0
    %v28 = vadd.f32 %v26, 1.0
    %v29 = vmax.f32 %v27, 1e-08
    %v30 = vmax.f32 %v28, 1e-08
    %v31 = vmul.f32 %v29, %v29
    %v32 = vmul.f32 %v30, %v30
    %33 = vst [vmem:[#allocation5] sm:$0xff] %v31
    %34 = vst [vmem:[#allocation5 + $0x8] sm:$0xff] %v32
    // Predicated region
    $region10: #{tpu_custom_call.1} parent=1 // pred_check
      _
    $region11: #{tpu_custom_call.1} parent=1 // pred_check_branch
      %36 = sbr.rel (0) target = $region13
    $region12: #{tpu_custom_call.1} parent=1 // pred_region
      %38 = vsyncadd [#allocation4], 0
      %s40 = sshll.u32 [#allocation5], 4
      %s41 = int_to_ptr.vmem [resolvable:$true] %s40
      %s42 = sshll.u32 %s1, 4
      %s43 = int_to_ptr.hbm [resolvable:$true] %s42
      %45 = dma.vmem_to_hbm [thread:$0]  %s41, 256, %s43, [#allocation4]
    $region13: #{tpu_custom_call.1} parent=1 // pred_fallthru
      _
    // Predicated region
    $region14: #{tpu_custom_call.1} parent=1 // pred_check
      _
    $region15: #{tpu_custom_call.1} parent=1 // pred_check_branch
      %47 = sbr.rel (0) target = $region17
    $region16: #{tpu_custom_call.1} parent=1 // pred_region
      %49 = dma.done [#allocation4], 256
    $region17: #{tpu_custom_call.1} parent=1 // pred_fallthru
      _
    %50 = vsyncpa [#allocation3], 1
    %51 = vsyncpa [#allocation4], 1

</llo_original>
